<compile_context>
chip_gen: v7x
topology: tpu7x:2x2x1
jax: 0.10.0
libtpu: 0.0.40
codegen_flags: <defaults>
</compile_context>

<pallas_src>
import functools

import jax
import jax.numpy as jnp
from jax.experimental import pallas as pl
from jax.experimental.pallas import tpu as pltpu


# ----------------------------------------------------------------------------
# Kernels: input tile is (1, C, TL) -> kernel works on a (C, TL) slab where the
# reduction axis (channels) is the sublane axis and the lane axis is spatial.
# ----------------------------------------------------------------------------

def _ln_withbias_kernel(x_ref, w_ref, b_ref, o_ref):
    x = x_ref[0].astype(jnp.float32)                    # (C, TL)
    mu = jnp.mean(x, axis=0, keepdims=True)             # (1, TL)
    d = x - mu
    var = jnp.mean(d * d, axis=0, keepdims=True)        # unbiased=False
    y = d * jax.lax.rsqrt(var + 1e-5)                   # EUP rsqrt
    o_ref[0] = (y * w_ref[...] + b_ref[...]).astype(o_ref.dtype)


def _ln_biasfree_kernel(x_ref, w_ref, o_ref):
    x = x_ref[0].astype(jnp.float32)                    # (C, TL)
    mu = jnp.mean(x, axis=0, keepdims=True)
    d = x - mu
    var = jnp.mean(d * d, axis=0, keepdims=True)
    # BiasFree variant: numerator is x (not x - mu), but var is still about the mean.
    o_ref[0] = (x * jax.lax.rsqrt(var + 1e-5) * w_ref[...]).astype(o_ref.dtype)


# ----------------------------------------------------------------------------
# Generation-aware tiling helpers
# ----------------------------------------------------------------------------

_MIB = 1024 * 1024

# per_block_budget: target bytes for ONE (1, C_pad, TL) block (2x in + 2x out
# double-buffers => ~4x this is pipelined in VMEM).  vmem_limit: explicit scoped
# VMEM allowance (kept well under each generation's physical VMEM).
_GEN_CONFIG = {
    "v5": dict(per_block_budget=2 * _MIB, vmem_limit=64 * _MIB),   # 128 MiB phys, 16 MiB default scoped
    "v6": dict(per_block_budget=4 * _MIB, vmem_limit=96 * _MIB),   # 128 MiB phys
    "v7": dict(per_block_budget=6 * _MIB, vmem_limit=48 * _MIB),   # 64 MiB phys per TC, 3.2 TB/s HBM
}
_DEFAULT_CONFIG = dict(per_block_budget=2 * _MIB, vmem_limit=32 * _MIB)


def _tpu_gen_key():
    try:
        kind = jax.devices()[0].device_kind.lower()
    except Exception:
        return None
    if "v7" in kind or "7x" in kind:
        return "v7"
    if "v6" in kind:
        return "v6"
    if "v5" in kind:
        return "v5"
    return None


def _divisors(n):
    out = set()
    i = 1
    while i * i <= n:
        if n % i == 0:
            out.add(i)
            out.add(n // i)
        i += 1
    return sorted(out)


def _choose_l_tile(l_pad, c_pad, itemsize, per_block_budget, batch, min_steps=8):
    """Largest 128-multiple divisor of l_pad that fits the byte budget while keeping
    batch * (l_pad // TL) >= min_steps grid steps (when achievable)."""
    n128 = l_pad // 128
    cands = [128 * d for d in _divisors(n128)]                     # all valid tiles
    max_tl = max(128, (per_block_budget // max(1, c_pad * itemsize)) // 128 * 128)
    fit = [t for t in cands if t <= max_tl] or [128]
    # Don't demand more steps than the problem can supply (tiny L / tiny B).
    target_steps = min(min_steps, batch * n128)
    ok = [t for t in fit if batch * (l_pad // t) >= target_steps]
    return max(ok) if ok else min(fit)


# ----------------------------------------------------------------------------
# Wrapper
# ----------------------------------------------------------------------------

def layernorm_nchw(x_nchw, weight, bias=None, ln_type='WithBias'):
    """Forward of the Restormer LayerNorm module: NCHW in, NCHW out."""
    if ln_type == 'WithBias':
        assert bias is not None, "ln_type='WithBias' requires a bias parameter"

    B, C, H, W = x_nchw.shape
    L = H * W
    x = x_nchw.reshape(B, C, L)                          # free reshape (no relayout)

    # Pad the spatial (lane) axis to a multiple of 128 so every store is lane-dense
    # and the grid stays pipelineable.  The channel reduction is per-lane-column, so
    # padded columns are independent and simply sliced off afterwards.
    L_pad = ((L + 127) // 128) * 128
    if L_pad != L:
        x = jnp.pad(x, ((0, 0), (0, 0), (0, L_pad - L)))

    cfg = _GEN_CONFIG.get(_tpu_gen_key(), _DEFAULT_CONFIG)
    itemsize = jnp.dtype(x_nchw.dtype).itemsize
    sublane_pack = max(1, 32 // itemsize)                # 8 for f32, 16 for bf16, 32 for i8
    c_pad = ((C + sublane_pack - 1) // sublane_pack) * sublane_pack
    # TODO(synk): for tiny / unaligned C (e.g. C=4 f32) the sublane axis is padded to
    # `c_pad`, wasting vreg sublanes; typical Restormer dims (48/96/192/384) are aligned.

    TL = _choose_l_tile(L_pad, c_pad, itemsize, cfg["per_block_budget"], B)
    nL = L_pad // TL
    grid = (B, nL)

    x_spec = pl.BlockSpec((1, C, TL), lambda b, l: (b, 0, l))
    o_spec = pl.BlockSpec((1, C, TL), lambda b, l: (b, 0, l))
    p_spec = pl.BlockSpec((C, 1), lambda b, l: (0, 0))
    w2 = weight.reshape(C, 1)

    if ln_type == 'WithBias':
        kernel = _ln_withbias_kernel
        in_specs = [x_spec, p_spec, p_spec]
        args = (x, w2, bias.reshape(C, 1))
    else:  # 'BiasFree'
        kernel = _ln_biasfree_kernel
        in_specs = [x_spec, p_spec]
        args = (x, w2)

    out = pl.pallas_call(
        kernel,
        out_shape=jax.ShapeDtypeStruct((B, C, L_pad), x_nchw.dtype),
        grid=grid,
        in_specs=in_specs,
        out_specs=o_spec,
        compiler_params=pltpu.CompilerParams(
            dimension_semantics=("parallel", "parallel"),
            vmem_limit_bytes=cfg["vmem_limit"],
        ),
    )(*args)

    if L_pad != L:
        out = out[:, :, :L]
    return out.reshape(B, C, H, W)


# ----------------------------------------------------------------------------
# Pure-JAX reference (mirrors the PyTorch module exactly: to_3d -> LN -> to_4d)
# ----------------------------------------------------------------------------

def reference_layernorm_nchw(x_nchw, weight, bias=None, ln_type='WithBias'):
    B, C, H, W = x_nchw.shape
    t = jnp.transpose(x_nchw, (0, 2, 3, 1)).reshape(B, H * W, C)   # to_3d
    mu = jnp.mean(t, axis=-1, keepdims=True)
    var = jnp.mean((t - mu) ** 2, axis=-1, keepdims=True)          # unbiased=False
    if ln_type == 'WithBias':
        y = (t - mu) / jnp.sqrt(var + 1e-5) * weight + bias
    else:
        y = t / jnp.sqrt(var + 1e-5) * weight
    return jnp.transpose(y.reshape(B, H, W, C), (0, 3, 1, 2))      # to_4d


# ----------------------------------------------------------------------------
# Self-test
# ----------------------------------------------------------------------------

if __name__ == "__main__":
    key = jax.random.PRNGKey(0)
    kx, kw, kb, kx2 = jax.random.split(key, 4)

    # Main test: shapes consistent with the module usage.
    B, C, H, W = 2, 4, 16, 16
    x = jax.random.normal(kx, (B, C, H, W), jnp.float32)
    # Module init is weight=ones / bias=zeros; use perturbed params so the affine
    # part of the semantics is actually exercised.
    weight = 1.0 + 0.1 * jax.random.normal(kw, (C,), jnp.float32)
    bias = 0.1 * jax.random.normal(kb, (C,), jnp.float32)

    fwd_wb = jax.jit(functools.partial(layernorm_nchw, ln_type='WithBias'))
    fwd_bf = jax.jit(functools.partial(layernorm_nchw, bias=None, ln_type='BiasFree'))

    y_wb = jax.block_until_ready(fwd_wb(x, weight, bias))
    y_bf = jax.block_until_ready(fwd_bf(x, weight))

    ref_wb = reference_layernorm_nchw(x, weight, bias, 'WithBias')
    ref_bf = reference_layernorm_nchw(x, weight, None, 'BiasFree')

    assert y_wb.shape == x.shape and y_wb.dtype == x.dtype
    assert y_bf.shape == x.shape and y_bf.dtype == x.dtype
    err_wb = float(jnp.max(jnp.abs(y_wb - ref_wb)))
    err_bf = float(jnp.max(jnp.abs(y_bf - ref_bf)))
    if not (jnp.isfinite(err_wb) and jnp.isfinite(err_bf)) or err_wb > 1e-4 or err_bf > 1e-4:
        raise AssertionError(f"mismatch vs reference: WithBias={err_wb} BiasFree={err_bf}")

    # Secondary test: non-128-aligned spatial extent exercises the padding path.
    x2 = jax.random.normal(kx2, (1, C, 10, 10), jnp.float32)
    y2 = jax.block_until_ready(fwd_wb(x2, weight, bias))
    ref2 = reference_layernorm_nchw(x2, weight, bias, 'WithBias')
    err2 = float(jnp.max(jnp.abs(y2 - ref2)))
    if not jnp.isfinite(err2) or err2 > 1e-4:
        raise AssertionError(f"padded-path mismatch vs reference: {err2}")

    print("KERNEL_OK")
</pallas_src>

<mosaic_0001>
module attributes {stable_mosaic.version = 11 : i64} {
  func.func @_ln_withbias_kernel(%arg0: i32, %arg1: i32, %arg2: memref<1x4x128xf32, #tpu.memory_space<vmem>>, %arg3: memref<4x1xf32, #tpu.memory_space<vmem>>, %arg4: memref<4x1xf32, #tpu.memory_space<vmem>>, %arg5: memref<1x4x128xf32, #tpu.memory_space<vmem>>) attributes {dimension_semantics = [#tpu.dimension_semantics<parallel>, #tpu.dimension_semantics<parallel>], iteration_bounds = array<i64: 2, 2>, scalar_prefetch = 0 : i64, scratch_operands = 0 : i64, tpu.core_type = #tpu.core_type<tc>, window_params = [{transform_indices = @transform_0, window_bounds = array<i64: 1, 4, 128>}, {pipeline_mode = #tpu.pipeline_mode<synchronous>, transform_indices = @transform_1, window_bounds = array<i64: 4, 1>}, {pipeline_mode = #tpu.pipeline_mode<synchronous>, transform_indices = @transform_2, window_bounds = array<i64: 4, 1>}, {transform_indices = @transform_3, window_bounds = array<i64: 1, 4, 128>}]} {
    %c0 = arith.constant 0 : index
    %c0_0 = arith.constant 0 : index
    %c0_1 = arith.constant 0 : index
    %0 = vector.load %arg2[%c0, %c0_0, %c0_1] : memref<1x4x128xf32, #tpu.memory_space<vmem>>, vector<1x4x128xf32>
    %1 = vector.shape_cast %0 : vector<1x4x128xf32> to vector<4x128xf32>
    %cst = arith.constant dense<0.000000e+00> : vector<128xf32>
    %2 = vector.multi_reduction <add>, %1, %cst [0] : vector<4x128xf32> to vector<128xf32>
    %3 = vector.shape_cast %2 : vector<128xf32> to vector<1x128xf32>
    %cst_2 = arith.constant 4.000000e+00 : f32
    %4 = vector.broadcast %cst_2 : f32 to vector<1x128xf32>
    %5 = arith.divf %3, %4 : vector<1x128xf32>
    %6 = vector.broadcast %5 : vector<1x128xf32> to vector<4x128xf32>
    %7 = arith.subf %1, %6 : vector<4x128xf32>
    %8 = arith.mulf %7, %7 : vector<4x128xf32>
    %cst_3 = arith.constant dense<0.000000e+00> : vector<128xf32>
    %9 = vector.multi_reduction <add>, %8, %cst_3 [0] : vector<4x128xf32> to vector<128xf32>
    %10 = vector.shape_cast %9 : vector<128xf32> to vector<1x128xf32>
    %cst_4 = arith.constant 4.000000e+00 : f32
    %11 = vector.broadcast %cst_4 : f32 to vector<1x128xf32>
    %12 = arith.divf %10, %11 : vector<1x128xf32>
    %cst_5 = arith.constant 9.99999974E-6 : f32
    %13 = vector.broadcast %cst_5 : f32 to vector<1x128xf32>
    %14 = arith.addf %12, %13 : vector<1x128xf32>
    %15 = math.rsqrt %14 : vector<1x128xf32>
    %16 = vector.broadcast %15 : vector<1x128xf32> to vector<4x128xf32>
    %17 = arith.mulf %7, %16 : vector<4x128xf32>
    %c0_6 = arith.constant 0 : index
    %c0_7 = arith.constant 0 : index
    %18 = vector.load %arg3[%c0_6, %c0_7] : memref<4x1xf32, #tpu.memory_space<vmem>>, vector<4x1xf32>
    %19 = vector.broadcast %18 : vector<4x1xf32> to vector<4x128xf32>
    %20 = arith.mulf %17, %19 : vector<4x128xf32>
    %c0_8 = arith.constant 0 : index
    %c0_9 = arith.constant 0 : index
    %21 = vector.load %arg4[%c0_8, %c0_9] : memref<4x1xf32, #tpu.memory_space<vmem>>, vector<4x1xf32>
    %22 = vector.broadcast %21 : vector<4x1xf32> to vector<4x128xf32>
    %23 = arith.addf %20, %22 : vector<4x128xf32>
    %c0_10 = arith.constant 0 : index
    %c0_11 = arith.constant 0 : index
    %c0_12 = arith.constant 0 : index
    %24 = vector.load %arg5[%c0_10, %c0_11, %c0_12] : memref<1x4x128xf32, #tpu.memory_space<vmem>>, vector<1x4x128xf32>
    %25 = vector.shape_cast %24 : vector<1x4x128xf32> to vector<4x128xf32>
    %26 = vector.shape_cast %23 : vector<4x128xf32> to vector<1x4x128xf32>
    tpu.vector_store %arg5[%c0_10, %c0_11, %c0_12], %26 {strides = array<i32>} : memref<1x4x128xf32, #tpu.memory_space<vmem>>, vector<1x4x128xf32>,
    return
  }
  func.func @transform_0(%arg0: i32, %arg1: i32) -> (i32, i32, i32) {
    %c0_i32 = arith.constant 0 : i32
    %c0_i32_0 = arith.constant 0 : i32
    return %arg0, %c0_i32, %arg1 : i32, i32, i32
  }
  func.func @transform_1(%arg0: i32, %arg1: i32) -> (i32, i32) {
    %c0_i32 = arith.constant 0 : i32
    %c0_i32_0 = arith.constant 0 : i32
    %c0_i32_1 = arith.constant 0 : i32
    return %c0_i32, %c0_i32_0 : i32, i32
  }
  func.func @transform_2(%arg0: i32, %arg1: i32) -> (i32, i32) {
    %c0_i32 = arith.constant 0 : i32
    %c0_i32_0 = arith.constant 0 : i32
    %c0_i32_1 = arith.constant 0 : i32
    return %c0_i32, %c0_i32_0 : i32, i32
  }
  func.func @transform_3(%arg0: i32, %arg1: i32) -> (i32, i32, i32) {
    %c0_i32 = arith.constant 0 : i32
    %c0_i32_0 = arith.constant 0 : i32
    return %arg0, %c0_i32, %arg1 : i32, i32, i32
  }
}

</mosaic_0001>

<llo_original>
// kernel: layernorm_nchw.1
$region0: #{layernorm_nchw.1}
  #allocation0 [shape = 'u32[]', space=smem, size = 0x4, offset = 0x4, fixed_abs, tag = 'smem constant byte address 0x4 - core index']
  #allocation1 [shape = 'u32[144,128]{1,0:T(1,128)}', space=vmem, size = 0x12000, scoped, tag = 'internal scratch']
  %s0 = inlined_call_operand.vmem [shape: f32[2,4,256], index: 0, kind: input, shape index: {}]
  %s1 = inlined_call_operand.vmem [shape: f32[4,1], index: 1, kind: input, shape index: {}]
  %s2 = inlined_call_operand.vmem [shape: f32[4,1], index: 2, kind: input, shape index: {}]
  %s3 = inlined_call_operand.vmem [shape: f32[2,4,256], index: 3, kind: output, shape index: {}]
  %s4 = sld [smem:[#allocation0]]
  $region45: #{layernorm_nchw.1} parent=0
    _
  %s6 = ssub.s32 1, %s4
  %s7 = scalar_select 0, %s6, %s4
  loop: start=0, step=1, limit=6
  $region2: #{layernorm_nchw.1} parent=0 // loop_pre_header
    _
  $region3: #{layernorm_nchw.1} parent=0 // loop_header
    %s9 = sphi 0, %s13
    %p10 = scmp.ge.s32.totalorder %s9, 6
    %s16 = sphi 0, %s28
    %s17 = sphi 0, %s24
    %s18 = sphi 0, %s16
    %s19 = sphi 0, %s17
    %s20 = sphi 0, %s18
    %s21 = sphi 0, %s19
    %s33 = sphi 0, %s35
    %s36 = sphi 0, %s33
    %s37 = sphi 0, %s36
    %s53 = sphi 0, %s37
    %s57 = sphi 0, %s57
    %s59 = sphi 0, %s57
    %s60 = sphi 0, %s59
    %s74 = sphi 0, %s60
    %s78 = sphi 0, %s78
    %s80 = sphi 0, %s78
    %s81 = sphi 0, %s80
    %s95 = sphi 0, %s81
    %s103 = sphi 0, %s105
    %s106 = sphi 0, %s103
    %s107 = sphi 0, %s106
    %s123 = sphi 0, %s107
  $region4: #{layernorm_nchw.1} parent=0 // loop_header_branch
    %12 = sbr.rel (%p10) target = $region8
  $region5: #{layernorm_nchw.1} parent=0 // loop_body
    %s14 = ssub.s32 %s9, 1
    %s15 = ssub.s32 %s9, 2
    %s22 = sadd.s32 1, %s17
    %p23 = scmp.ge.s32.totalorder %s22, 2
    %s24 = scalar_select %p23, 0, %s22
    %s25 = sadd.s32 1, %s16
    %s26 = scalar_select %p23, %s25, %s16
    %p27 = scmp.ge.s32.totalorder %s26, 2
    %s28 = scalar_select %p27, 0, %s26
    %s29 = ssub.s32 %s16, %s28
    %s30 = ssub.s32 %s17, %s24
    %s31 = sor.u32 %s29, %s30
    %p32 = scmp.eq.s32.totalorder %s31, 0
    %s34 = sadd.s32 %s33, 1
    %s35 = scalar_select %p32, %s33, %s34
    %p38 = pneg %p32
    %p39 = scmp.eq.s32.totalorder %s9, 3
    %p40 = por %p38, %p39
    %p41 = scmp.ne.s32.totalorder %s33, %s36
    %p42 = scmp.eq.s32.totalorder %s9, 0
    %p43 = por %p41, %p42
    %p44 = scmp.ne.s32.totalorder %s33, %s36
    %p45 = scmp.eq.s32.totalorder %s14, 3
    %p46 = por %p44, %p45
    %p47 = scmp.ne.s32.totalorder %s36, %s37
    %p48 = scmp.eq.s32.totalorder %s14, 0
    %p49 = por %p47, %p48
    %p50 = scmp.ne.s32.totalorder %s36, %s37
    %p51 = scmp.eq.s32.totalorder %s15, 3
    %p52 = por %p50, %p51
    %p54 = scmp.ne.s32.totalorder %s37, %s53
    %p55 = scmp.eq.s32.totalorder %s15, 0
    %p56 = por %p54, %p55
    %s58 = sadd.s32 %s57, 1
    %p61 = scmp.eq.s32.totalorder %s9, 3
    %p62 = scmp.ne.s32.totalorder %s57, %s59
    %p63 = scmp.eq.s32.totalorder %s9, 0
    %p64 = por %p62, %p63
    %p65 = scmp.ne.s32.totalorder %s57, %s59
    %p66 = scmp.eq.s32.totalorder %s14, 3
    %p67 = por %p65, %p66
    %p68 = scmp.ne.s32.totalorder %s59, %s60
    %p69 = scmp.eq.s32.totalorder %s14, 0
    %p70 = por %p68, %p69
    %p71 = scmp.ne.s32.totalorder %s59, %s60
    %p72 = scmp.eq.s32.totalorder %s15, 3
    %p73 = por %p71, %p72
    %p75 = scmp.ne.s32.totalorder %s60, %s74
    %p76 = scmp.eq.s32.totalorder %s15, 0
    %p77 = por %p75, %p76
    %s79 = sadd.s32 %s78, 1
    %p82 = scmp.eq.s32.totalorder %s9, 3
    %p83 = scmp.ne.s32.totalorder %s78, %s80
    %p84 = scmp.eq.s32.totalorder %s9, 0
    %p85 = por %p83, %p84
    %p86 = scmp.ne.s32.totalorder %s78, %s80
    %p87 = scmp.eq.s32.totalorder %s14, 3
    %p88 = por %p86, %p87
    %p89 = scmp.ne.s32.totalorder %s80, %s81
    %p90 = scmp.eq.s32.totalorder %s14, 0
    %p91 = por %p89, %p90
    %p92 = scmp.ne.s32.totalorder %s80, %s81
    %p93 = scmp.eq.s32.totalorder %s15, 3
    %p94 = por %p92, %p93
    %p96 = scmp.ne.s32.totalorder %s81, %s95
    %p97 = scmp.eq.s32.totalorder %s15, 0
    %p98 = por %p96, %p97
    %s99 = ssub.s32 %s16, %s28
    %s100 = ssub.s32 %s17, %s24
    %s101 = sor.u32 %s99, %s100
    %p102 = scmp.eq.s32.totalorder %s101, 0
    %s104 = sadd.s32 %s103, 1
    %s105 = scalar_select %p102, %s103, %s104
    %p108 = pneg %p102
    %p109 = scmp.eq.s32.totalorder %s9, 3
    %p110 = por %p108, %p109
    %p111 = scmp.ne.s32.totalorder %s103, %s106
    %p112 = scmp.eq.s32.totalorder %s9, 0
    %p113 = por %p111, %p112
    %p114 = scmp.ne.s32.totalorder %s103, %s106
    %p115 = scmp.eq.s32.totalorder %s14, 3
    %p116 = por %p114, %p115
    %p117 = scmp.ne.s32.totalorder %s106, %s107
    %p118 = scmp.eq.s32.totalorder %s14, 0
    %p119 = por %p117, %p118
    %p120 = scmp.ne.s32.totalorder %s106, %s107
    %p121 = scmp.eq.s32.totalorder %s15, 3
    %p122 = por %p120, %p121
    %p124 = scmp.ne.s32.totalorder %s107, %s123
    %p125 = scmp.eq.s32.totalorder %s15, 0
    %p126 = por %p124, %p125
    %p127 = scmp.le.s32.totalorder 1, %s9
    %p128 = scmp.lt.s32.totalorder %s9, 5
    %p129 = pnand %p127, %p128
    %p130 = pneg %p129
    // Predicated region
    $region9: #{layernorm_nchw.1} parent=5 // pred_check
      _
    $region10: #{layernorm_nchw.1} parent=5 // pred_check_branch
      %132 = sbr.rel (%p129) target = $region12
    $region11: #{layernorm_nchw.1} parent=5 // pred_region
      %s133 = ssub.s32 %s9, 1
      // Predicated region
      $region13: #{layernorm_nchw.1} parent=11 // pred_check
        %p134 = pneg %p70
      $region14: #{layernorm_nchw.1} parent=11 // pred_check_branch
        %136 = sbr.rel (%p134) target = $region16
      $region15: #{layernorm_nchw.1} parent=11 // pred_region
        _
      $region16: #{layernorm_nchw.1} parent=11 // pred_fallthru
        _
      // Predicated region
      $region17: #{layernorm_nchw.1} parent=11 // pred_check
        %p137 = pneg %p91
      $region18: #{layernorm_nchw.1} parent=11 // pred_check_branch
        %139 = sbr.rel (%p137) target = $region20
      $region19: #{layernorm_nchw.1} parent=11 // pred_region
        _
      $region20: #{layernorm_nchw.1} parent=11 // pred_fallthru
        _
    $region12: #{layernorm_nchw.1} parent=5 // pred_fallthru
      _
    %p140 = scmp.lt.s32.totalorder %s9, 4
    // Predicated region
    $region21: #{layernorm_nchw.1} parent=5 // pred_check
      %p141 = pneg %p140
    $region22: #{layernorm_nchw.1} parent=5 // pred_check_branch
      %143 = sbr.rel (%p141) target = $region24
    $region23: #{layernorm_nchw.1} parent=5 // pred_region
      // Predicated region
      $region25: #{layernorm_nchw.1} parent=23 // pred_check
        %p144 = pneg %p43
      $region26: #{layernorm_nchw.1} parent=23 // pred_check_branch
        %146 = sbr.rel (%p144) target = $region28
      $region27: #{layernorm_nchw.1} parent=23 // pred_region
        %p147 = scmp.lt.s32.totalorder %s16, 1
        %s148 = scalar_select %p147, %s16, 1
        %p149 = scmp.lt.s32.totalorder %s17, 1
        %s150 = scalar_select %p149, %s17, 1
        %s151 = smul.addr %s148, 2
        %s152 = sadd.s32 %s150, %s151
        %s153 = smul.addr %s152, 4
        %s154 = scalar_lea.vmem %s0, %s153
      $region28: #{layernorm_nchw.1} parent=23 // pred_fallthru
        _
    $region24: #{layernorm_nchw.1} parent=5 // pred_fallthru
      _
    %p155 = scmp.le.s32.totalorder 1, %s9
    %p156 = scmp.lt.s32.totalorder %s9, 5
    %p157 = pnand %p155, %p156
    %p158 = pneg %p157
    // Predicated region
    $region29: #{layernorm_nchw.1} parent=5 // pred_check
      _
    $region30: #{layernorm_nchw.1} parent=5 // pred_check_branch
      %160 = sbr.rel (%p157) target = $region32
    $region31: #{layernorm_nchw.1} parent=5 // pred_region
      %s161 = ssub.s32 %s9, 1
      %p162 = scmp.lt.s32.totalorder %s18, 1
      %s163 = scalar_select %p162, %s18, 1
      %p164 = scmp.lt.s32.totalorder %s19, 1
      %s165 = scalar_select %p164, %s19, 1
      %s166 = smul.addr %s163, 2
      %s167 = sadd.s32 %s165, %s166
      %s168 = smul.addr %s167, 4
      %s169 = scalar_lea.vmem %s0, %s168
      %p170 = pneg %p49
      %p171 = pneg %p46
      %p172 = pneg %p70
      %p173 = pneg %p67
      %p174 = pneg %p91
      %p175 = pneg %p88
      %p176 = pneg %p119
      %p177 = pneg %p116
      %p178 = scmp.lt.s32.totalorder %s18, 1
      %s179 = scalar_select %p178, %s18, 1
      %p180 = scmp.lt.s32.totalorder %s19, 1
      %s181 = scalar_select %p180, %s19, 1
      %s182 = smul.addr %s179, 2
      %s183 = sadd.s32 %s181, %s182
      %s184 = smul.addr %s183, 4
      %s185 = scalar_lea.vmem %s3, %s184
      %p186 = scmp.lt.s32.totalorder %s18, 1
      %s187 = scalar_select %p186, %s18, 1
      %p188 = scmp.lt.s32.totalorder %s19, 1
      %s189 = scalar_select %p188, %s19, 1
      %s190 = smul.addr %s187, 2
      %s191 = sadd.s32 %s189, %s190
      %s192 = smul.addr %s191, 4
      %s193 = scalar_lea.vmem %s0, %s192
      %p194 = scmp.lt.s32.totalorder %s18, 1
      %s195 = scalar_select %p194, %s18, 1
      %p196 = scmp.lt.s32.totalorder %s19, 1
      %s197 = scalar_select %p196, %s19, 1
      %s198 = smul.addr %s195, 2
      %s199 = sadd.s32 %s197, %s198
      %s200 = smul.addr %s199, 4
      %s201 = scalar_lea.vmem %s3, %s200
      %v202 = vld [vmem:[%s193] sm:$0xf]
      %vm203 = vcmask 1043456
      %v204 = vsel %vm203, %v202, 0.0
      %v205 = vrot.slane %v204, 4
      %v206 = vadd.f32 %v204, %v205
      %v207 = vrot.slane %v206, 2
      %v208 = vadd.f32 %v206, %v207
      %v209 = vrot.slane %v208, 1
      %v210 = vadd.f32 %v208, %v209
      %v211 = vrcp.pop 4.0
      %v212 = vmul.f32 %v210, %v211
      %v213 = vsub.f32 %v202, %v212
      %v214 = vmul.f32 %v213, %v213
      %v215 = vsel %vm203, %v214, 0.0
      %v216 = vrot.slane %v215, 4
      %v217 = vadd.f32 %v215, %v216
      %v218 = vrot.slane %v217, 2
      %v219 = vadd.f32 %v217, %v218
      %v220 = vrot.slane %v219, 1
      %v221 = vadd.f32 %v219, %v220
      %v222 = vmul.f32 %v221, %v211
      %v223 = vadd.f32 %v222, 1e-05
      %v224 = vrsqrt.pop %v223
      %v225 = vmul.f32 %v213, %v224
      %v226 = vld [vmem:[%s1] sm:$0xf]
      %228 = vset.pattern.permute.xlu0 0
      %229 = vperm.xlu0 %228, %v226
      %v230 = vpop.permute.xlu0 %229
      %v232 = vmul.f32 %v225, %v230
      %v233 = vld [vmem:[%s2] sm:$0xf]
      %235 = vset.pattern.permute.xlu0 0
      %236 = vperm.xlu0 %235, %v233
      %v237 = vpop.permute.xlu0 %236
      %v239 = vadd.f32 %v232, %v237
      %240 = vst [vmem:[%s201] sm:$0xf] %v239
      %p241 = scmp.lt.s32.totalorder %s18, 1
      %s242 = scalar_select %p241, %s18, 1
      %p243 = scmp.lt.s32.totalorder %s19, 1
      %s244 = scalar_select %p243, %s19, 1
      %s245 = smul.addr %s242, 2
      %s246 = sadd.s32 %s244, %s245
      %s247 = smul.addr %s246, 4
      %s248 = scalar_lea.vmem %s3, %s247
      // Predicated region
      $region33: #{layernorm_nchw.1} parent=31 // pred_check
        %p249 = pneg %p116
      $region34: #{layernorm_nchw.1} parent=31 // pred_check_branch
        %251 = sbr.rel (%p249) target = $region36
      $region35: #{layernorm_nchw.1} parent=31 // pred_region
        _
      $region36: #{layernorm_nchw.1} parent=31 // pred_fallthru
        _
    $region32: #{layernorm_nchw.1} parent=5 // pred_fallthru
      _
    %p252 = scmp.le.s32.totalorder 2, %s9
    // Predicated region
    $region37: #{layernorm_nchw.1} parent=5 // pred_check
      %p253 = pneg %p252
    $region38: #{layernorm_nchw.1} parent=5 // pred_check_branch
      %255 = sbr.rel (%p253) target = $region40
    $region39: #{layernorm_nchw.1} parent=5 // pred_region
      %s256 = ssub.s32 %s9, 2
      // Predicated region
      $region41: #{layernorm_nchw.1} parent=39 // pred_check
        %p257 = pneg %p122
      $region42: #{layernorm_nchw.1} parent=39 // pred_check_branch
        %259 = sbr.rel (%p257) target = $region44
      $region43: #{layernorm_nchw.1} parent=39 // pred_region
        %p260 = scmp.lt.s32.totalorder %s20, 1
        %s261 = scalar_select %p260, %s20, 1
        %p262 = scmp.lt.s32.totalorder %s21, 1
        %s263 = scalar_select %p262, %s21, 1
        %s264 = smul.addr %s261, 2
        %s265 = sadd.s32 %s263, %s264
        %s266 = smul.addr %s265, 4
        %s267 = scalar_lea.vmem %s3, %s266
      $region44: #{layernorm_nchw.1} parent=39 // pred_fallthru
        _
    $region40: #{layernorm_nchw.1} parent=5 // pred_fallthru
      _
  $region6: #{layernorm_nchw.1} parent=0 // loop_footer
    %s13 = sadd.s32 1, %s9
  $region7: #{layernorm_nchw.1} parent=0 // loop_footer_branch
    %8 = sbr.rel target = $region3
  $region8: #{layernorm_nchw.1} parent=0 // loop_exit
    _

</llo_original>
